<compile_context>
chip_gen: v5e
topology: v5e:2x2
jax: 0.10.0
libtpu: 0.0.40
codegen_flags: <defaults>
</compile_context>

<pallas_src>
import functools

import jax
import jax.numpy as jnp
from jax.experimental import pallas as pl
from jax.experimental.pallas import tpu as pltpu


def _round_up(x, m):
    return (x + m - 1) // m * m


# --------------------------------------------------------------------------
# Kernels
# --------------------------------------------------------------------------
def _single_pass_kernel(fp_ref, tp_ref, fw_ref, cs_ref, out_ref, *, inv_m):
    """Whole point axis in one lane block: reduce + regularize in one step."""
    d = fp_ref[...].astype(jnp.float32) - tp_ref[...].astype(jnp.float32)
    wsq = d * d * fw_ref[...].astype(jnp.float32)
    cs = cs_ref[...].astype(jnp.float32)
    reg = jnp.sum(cs * cs, axis=1, keepdims=True) * inv_m
    out_ref[...] = jnp.sum(wsq, axis=1, keepdims=True) + reg


def _multi_step_kernel(fp_ref, tp_ref, fw_ref, cs_ref, out_ref, acc_ref, *,
                       inv_m, tn, nd_total, lane_ragged):
    """Lane-tiled reduction with a resident (tb, 128) f32 accumulator."""
    n = pl.program_id(1)

    @pl.when(n == 0)
    def _init():
        acc_ref[...] = jnp.zeros_like(acc_ref)

    d = fp_ref[...].astype(jnp.float32) - tp_ref[...].astype(jnp.float32)
    wsq = d * d * fw_ref[...].astype(jnp.float32)

    if lane_ragged:
        # Edge lane block: out-of-range lanes hold garbage -> zero them
        # BEFORE accumulation (select kills NaN/Inf garbage as well).
        lane = jax.lax.broadcasted_iota(jnp.int32, wsq.shape, 1)
        wsq = jnp.where(lane + n * tn < nd_total, wsq, 0.0)

    # Balanced tree of vreg-aligned adds down to one 128-lane slab.
    parts = [wsq[:, k * 128:(k + 1) * 128] for k in range(tn // 128)]
    while len(parts) > 1:
        nxt = [a + b for a, b in zip(parts[0::2], parts[1::2])]
        if len(parts) % 2:
            nxt.append(parts[-1])
        parts = nxt
    acc_ref[...] += parts[0]

    @pl.when(n == pl.num_programs(1) - 1)
    def _finalize():
        cs = cs_ref[...].astype(jnp.float32)
        reg = jnp.sum(cs * cs, axis=1, keepdims=True) * inv_m
        out_ref[...] = jnp.sum(acc_ref[...], axis=1, keepdims=True) + reg


# --------------------------------------------------------------------------
# Wrapper
# --------------------------------------------------------------------------
def deep_flow_loss(flowed_points, gt_flowed_points, flowed_weights,
                   control_shift, *, lane_tile=32768, batch_tile=16):
    """Per-batch DeepFlowLoss (disp_l2 + control_shift regularizer).

    PyTorch layouts:
        flowed_points, gt_flowed_points : (B, N, D)
        flowed_weights                  : (B, N, 1)
        control_shift                   : (B, M, D)
    Returns per-batch loss of shape (B,), float32.
    """
    B, N, D = flowed_points.shape
    M = control_shift.shape[1]
    ND, MD = N * D, M * D
    f32 = jnp.float32

    # Free row-major flattens of the dominant (B, N, D) tensors — no HBM
    # transposes, no padding copies.
    fp = flowed_points.reshape(B, ND)
    tp = gt_flowed_points.reshape(B, ND)
    cs = control_shift.reshape(B, MD)
    # Per-point weights interleave-expanded x D, kept in the input dtype
    # (no f32 upcast in HBM); upcast happens inside the kernel.
    fw = jnp.repeat(flowed_weights.reshape(B, N), D, axis=1)

    itemsizes = [jnp.dtype(a.dtype).itemsize for a in (fp, tp, fw, cs)]
    min_sublane = max(8, 32 // max(min(itemsizes), 1))   # 8 f32, 16 bf16

    # --- batch tiling: >=2 batch blocks (megacore) whenever legal ----------
    if B <= min_sublane:
        tb = B                                    # full-dim block, any B legal
    else:
        tb = min(_round_up(batch_tile, min_sublane),
                 _round_up(pl.cdiv(B, 2), min_sublane))
    nb = pl.cdiv(B, tb)

    # --- lane (point*D) tiling ---------------------------------------------
    lane_cap = max(128, _round_up(lane_tile, 128))
    single_pass = _round_up(ND, 128) <= lane_cap
    if single_pass:
        tn, nn = ND, 1                            # full-dim lane block
    else:
        tn = lane_cap
        nn = pl.cdiv(ND, tn)
    lane_ragged = (not single_pass) and (ND % tn != 0)

    inv_m = 1.0 / M

    # --- right-sized VMEM budget (double-buffered streams + cs + acc) ------
    tb_pad = _round_up(tb, 16)
    tn_pad = _round_up(tn, 128)
    md_pad = _round_up(MD, 128)
    vmem_need = (2 * tb_pad * tn_pad * (itemsizes[0] + itemsizes[1] + itemsizes[2])
                 + 2 * tb_pad * md_pad * itemsizes[3]
                 + 3 * tb_pad * 128 * 4)
    vmem_limit = int(max(vmem_need * 1.5 + 4 * 1024 * 1024, 8 * 1024 * 1024))

    cost = pl.CostEstimate(
        flops=4 * B * ND + 3 * B * MD,
        transcendentals=0,
        bytes_accessed=(fp.size * itemsizes[0] + tp.size * itemsizes[1]
                        + fw.size * itemsizes[2] + cs.size * itemsizes[3]
                        + B * 4),
    )

    if single_pass:
        kernel = functools.partial(_single_pass_kernel, inv_m=inv_m)
        grid_spec = pltpu.PrefetchScalarGridSpec(
            num_scalar_prefetch=0,
            grid=(nb,),
            in_specs=[
                pl.BlockSpec((tb, tn), lambda b: (b, 0)),
                pl.BlockSpec((tb, tn), lambda b: (b, 0)),
                pl.BlockSpec((tb, tn), lambda b: (b, 0)),
                pl.BlockSpec((tb, MD), lambda b: (b, 0)),
            ],
            out_specs=pl.BlockSpec((tb, 1), lambda b: (b, 0)),
        )
        dim_sem = ("parallel",)
    else:
        kernel = functools.partial(_multi_step_kernel, inv_m=inv_m, tn=tn,
                                   nd_total=ND, lane_ragged=lane_ragged)
        grid_spec = pltpu.PrefetchScalarGridSpec(
            num_scalar_prefetch=0,
            grid=(nb, nn),
            in_specs=[
                pl.BlockSpec((tb, tn), lambda b, n: (b, n)),
                pl.BlockSpec((tb, tn), lambda b, n: (b, n)),
                pl.BlockSpec((tb, tn), lambda b, n: (b, n)),
                # control_shift: constant block index along the reduction axis
                # -> DMA'd once per batch tile, used only in the finalize step.
                pl.BlockSpec((tb, MD), lambda b, n: (b, 0)),
            ],
            out_specs=pl.BlockSpec((tb, 1), lambda b, n: (b, 0)),
            scratch_shapes=[pltpu.VMEM((tb, 128), f32)],
        )
        dim_sem = ("parallel", "arbitrary")

    out = pl.pallas_call(
        kernel,
        out_shape=jax.ShapeDtypeStruct((B, 1), f32),
        grid_spec=grid_spec,
        compiler_params=pltpu.CompilerParams(
            dimension_semantics=dim_sem,
            vmem_limit_bytes=vmem_limit,
        ),
        cost_estimate=cost,
    )(fp, tp, fw, cs)
    return out[:, 0]


# --------------------------------------------------------------------------
# Reference + tests
# --------------------------------------------------------------------------
def _reference(flowed_points, gt_flowed_points, flowed_weights, control_shift):
    l2 = (((flowed_points - gt_flowed_points) ** 2).sum(2, keepdims=True)
          * flowed_weights).sum(1)[..., 0]
    reg = (control_shift ** 2).sum(2).mean(1)
    return l2 + reg


def _make_inputs(key, B, N, D, M):
    k1, k2, k3, k4 = jax.random.split(key, 4)
    fp = jax.random.normal(k1, (B, N, D), dtype=jnp.float32)
    tp = jax.random.normal(k2, (B, N, D), dtype=jnp.float32)
    w = jax.random.uniform(k3, (B, N, 1), dtype=jnp.float32) + 0.1
    fw = w / w.sum(axis=1, keepdims=True)
    cs = 0.1 * jax.random.normal(k4, (B, M, D), dtype=jnp.float32)
    return fp, tp, fw, cs


if __name__ == "__main__":
    key = jax.random.PRNGKey(0)
    k0, k1, k2, k3 = jax.random.split(key, 4)

    # 1) single-pass path (ND = 384 lanes, one batch tile).
    fp, tp, fw, cs = _make_inputs(k0, B=2, N=128, D=3, M=64)
    loss = deep_flow_loss(fp, tp, fw, cs)
    jax.block_until_ready(loss)
    ref = _reference(fp, tp, fw, cs)
    assert loss.shape == (2,)
    assert jnp.allclose(loss, ref, rtol=1e-5, atol=1e-5)

    # 2) multi-step reduction with a ragged last lane block (in-kernel mask).
    fp, tp, fw, cs = _make_inputs(k1, B=2, N=300, D=3, M=50)
    loss = deep_flow_loss(fp, tp, fw, cs, lane_tile=256)
    jax.block_until_ready(loss)
    ref = _reference(fp, tp, fw, cs)
    assert jnp.allclose(loss, ref, rtol=1e-5, atol=1e-5)

    # 3) B > sublane tile: two batch blocks, clipped edge rows, single pass.
    fp, tp, fw, cs = _make_inputs(k2, B=10, N=128, D=3, M=16)
    loss = deep_flow_loss(fp, tp, fw, cs, batch_tile=8)
    jax.block_until_ready(loss)
    ref = _reference(fp, tp, fw, cs)
    assert loss.shape == (10,)
    assert jnp.allclose(loss, ref, rtol=1e-5, atol=1e-5)

    # 4) ragged lanes + ragged batch + multi-step accumulator together.
    fp, tp, fw, cs = _make_inputs(k3, B=10, N=300, D=3, M=32)
    loss = deep_flow_loss(fp, tp, fw, cs, lane_tile=256, batch_tile=8)
    jax.block_until_ready(loss)
    ref = _reference(fp, tp, fw, cs)
    assert jnp.allclose(loss, ref, rtol=1e-5, atol=1e-5)

    print("KERNEL_OK")
</pallas_src>

<mosaic_0001>
module attributes {stable_mosaic.version = 11 : i64} {
  func.func @_single_pass_kernel(%arg0: i32, %arg1: memref<2x384xf32, #tpu.memory_space<vmem>>, %arg2: memref<2x384xf32, #tpu.memory_space<vmem>>, %arg3: memref<2x384xf32, #tpu.memory_space<vmem>>, %arg4: memref<2x192xf32, #tpu.memory_space<vmem>>, %arg5: memref<2x1xf32, #tpu.memory_space<vmem>>) attributes {dimension_semantics = [#tpu.dimension_semantics<parallel>], iteration_bounds = array<i64: 1>, scalar_prefetch = 0 : i64, scratch_operands = 0 : i64, tpu.core_type = #tpu.core_type<tc>, window_params = [{transform_indices = @transform_0, window_bounds = array<i64: 2, 384>}, {transform_indices = @transform_1, window_bounds = array<i64: 2, 384>}, {transform_indices = @transform_2, window_bounds = array<i64: 2, 384>}, {transform_indices = @transform_3, window_bounds = array<i64: 2, 192>}, {transform_indices = @transform_4, window_bounds = array<i64: 2, 1>}]} {
    %c0 = arith.constant 0 : index
    %c0_0 = arith.constant 0 : index
    %0 = vector.load %arg1[%c0, %c0_0] : memref<2x384xf32, #tpu.memory_space<vmem>>, vector<2x384xf32>
    %c0_1 = arith.constant 0 : index
    %c0_2 = arith.constant 0 : index
    %1 = vector.load %arg2[%c0_1, %c0_2] : memref<2x384xf32, #tpu.memory_space<vmem>>, vector<2x384xf32>
    %2 = arith.subf %0, %1 : vector<2x384xf32>
    %3 = arith.mulf %2, %2 : vector<2x384xf32>
    %c0_3 = arith.constant 0 : index
    %c0_4 = arith.constant 0 : index
    %4 = vector.load %arg3[%c0_3, %c0_4] : memref<2x384xf32, #tpu.memory_space<vmem>>, vector<2x384xf32>
    %5 = arith.mulf %3, %4 : vector<2x384xf32>
    %c0_5 = arith.constant 0 : index
    %c0_6 = arith.constant 0 : index
    %6 = vector.load %arg4[%c0_5, %c0_6] : memref<2x192xf32, #tpu.memory_space<vmem>>, vector<2x192xf32>
    %7 = arith.mulf %6, %6 : vector<2x192xf32>
    %cst = arith.constant dense<0.000000e+00> : vector<2xf32>
    %8 = vector.multi_reduction <add>, %7, %cst [1] : vector<2x192xf32> to vector<2xf32>
    %9 = vector.shape_cast %8 : vector<2xf32> to vector<2x1xf32>
    %cst_7 = arith.constant 1.562500e-02 : f32
    %10 = vector.broadcast %cst_7 : f32 to vector<2x1xf32>
    %11 = arith.mulf %9, %10 : vector<2x1xf32>
    %cst_8 = arith.constant dense<0.000000e+00> : vector<2xf32>
    %12 = vector.multi_reduction <add>, %5, %cst_8 [1] : vector<2x384xf32> to vector<2xf32>
    %13 = vector.shape_cast %12 : vector<2xf32> to vector<2x1xf32>
    %14 = arith.addf %13, %11 : vector<2x1xf32>
    %c0_9 = arith.constant 0 : index
    %c0_10 = arith.constant 0 : index
    %15 = vector.load %arg5[%c0_9, %c0_10] : memref<2x1xf32, #tpu.memory_space<vmem>>, vector<2x1xf32>
    tpu.vector_store %arg5[%c0_9, %c0_10], %14 {strides = array<i32>} : memref<2x1xf32, #tpu.memory_space<vmem>>, vector<2x1xf32>,
    return
  }
  func.func @transform_0(%arg0: i32) -> (i32, i32) {
    %c0_i32 = arith.constant 0 : i32
    %c0_i32_0 = arith.constant 0 : i32
    return %arg0, %c0_i32 : i32, i32
  }
  func.func @transform_1(%arg0: i32) -> (i32, i32) {
    %c0_i32 = arith.constant 0 : i32
    %c0_i32_0 = arith.constant 0 : i32
    return %arg0, %c0_i32 : i32, i32
  }
  func.func @transform_2(%arg0: i32) -> (i32, i32) {
    %c0_i32 = arith.constant 0 : i32
    %c0_i32_0 = arith.constant 0 : i32
    return %arg0, %c0_i32 : i32, i32
  }
  func.func @transform_3(%arg0: i32) -> (i32, i32) {
    %c0_i32 = arith.constant 0 : i32
    %c0_i32_0 = arith.constant 0 : i32
    return %arg0, %c0_i32 : i32, i32
  }
  func.func @transform_4(%arg0: i32) -> (i32, i32) {
    %c0_i32 = arith.constant 0 : i32
    %c0_i32_0 = arith.constant 0 : i32
    return %arg0, %c0_i32 : i32, i32
  }
}

</mosaic_0001>

<llo_original>
// kernel: tpu_custom_call.1
$region0: #{tpu_custom_call.1}
  #allocation0 [shape = 'u32[]', space=smem, size = 0x4, offset = 0x4, fixed_abs, tag = 'smem constant byte address 0x4 - core index']
  #allocation1 [shape = 'u32[72,128]{1,0:T(1,128)}', space=vmem, size = 0x9000, scoped, tag = 'internal scratch']
  %s0 = inlined_call_operand.hbm [shape: f32[2,384], index: 0, kind: input, shape index: {}]
  %s1 = inlined_call_operand.hbm [shape: f32[2,384], index: 1, kind: input, shape index: {}]
  %s2 = inlined_call_operand.hbm [shape: f32[2,384], index: 2, kind: input, shape index: {}]
  %s3 = inlined_call_operand.hbm [shape: f32[2,192], index: 3, kind: input, shape index: {}]
  %s4 = inlined_call_operand.vmem [shape: f32[2,1], index: 4, kind: output, shape index: {}]
  %s5 = sld [smem:[#allocation0]]
  $region42: #{tpu_custom_call.1} parent=0
    _
  %s7 = ssub.s32 1, %s5
  %s8 = scalar_select 0, %s7, %s5
  $region1: #{tpu_custom_call.1} parent=0
    #allocation2 [shape = 'u8[3072]{0}', space=vmem, size = 0xc00, scoped, tag = 'input window, operand 0, single buffered']
    #allocation3 [shape = 's32[1]{0}', space=sflag, size = 0x4, scoped, tag = 'scoped memory for tpu_custom_call.1']
    #allocation4 [shape = 'u8[3072]{0}', space=vmem, size = 0xc00, scoped, tag = 'input window, operand 1, single buffered']
    #allocation5 [shape = 's32[1]{0}', space=sflag, size = 0x4, scoped, tag = 'scoped memory for tpu_custom_call.1']
    #allocation6 [shape = 'u8[3072]{0}', space=vmem, size = 0xc00, scoped, tag = 'input window, operand 2, single buffered']
    #allocation7 [shape = 'u8[2048]{0}', space=vmem, size = 0x800, scoped, tag = 'input window, operand 3, single buffered']
    #allocation8 [shape = 's32[1]{0}', space=sflag, size = 0x4, scoped, tag = 'scoped memory for tpu_custom_call.1']
    %9 = vsyncpa [#allocation3], 0
    %10 = vsyncpa [#allocation5], 0
    %11 = vsyncpa [#allocation8], 0
    // Predicated region
    $region2: #{tpu_custom_call.1} parent=1 // pred_check
      _
    $region3: #{tpu_custom_call.1} parent=1 // pred_check_branch
      %13 = sbr.rel (0) target = $region5
    $region4: #{tpu_custom_call.1} parent=1 // pred_region
      %15 = vsyncadd [#allocation3], 0
      %s17 = sshll.u32 %s0, 4
      %s18 = int_to_ptr.hbm [resolvable:$true] %s17
      %s19 = sshll.u32 [#allocation2], 4
      %s20 = int_to_ptr.vmem [resolvable:$true] %s19
      %22 = dma.hbm_to_vmem [thread:$0]  %s18, 96, %s20, [#allocation3]
    $region5: #{tpu_custom_call.1} parent=1 // pred_fallthru
      _
    // Predicated region
    $region6: #{tpu_custom_call.1} parent=1 // pred_check
      _
    $region7: #{tpu_custom_call.1} parent=1 // pred_check_branch
      %24 = sbr.rel (0) target = $region9
    $region8: #{tpu_custom_call.1} parent=1 // pred_region
      %26 = vsyncadd [#allocation5], 0
      %s28 = sshll.u32 %s1, 4
      %s29 = int_to_ptr.hbm [resolvable:$true] %s28
      %s30 = sshll.u32 [#allocation4], 4
      %s31 = int_to_ptr.vmem [resolvable:$true] %s30
      %33 = dma.hbm_to_vmem [thread:$0]  %s29, 96, %s31, [#allocation5]
    $region9: #{tpu_custom_call.1} parent=1 // pred_fallthru
      _
    // Predicated region
    $region10: #{tpu_custom_call.1} parent=1 // pred_check
      _
    $region11: #{tpu_custom_call.1} parent=1 // pred_check_branch
      %35 = sbr.rel (0) target = $region13
    $region12: #{tpu_custom_call.1} parent=1 // pred_region
      %37 = vsyncadd [#allocation5], 0
      %s39 = sshll.u32 %s2, 4
      %s40 = int_to_ptr.hbm [resolvable:$true] %s39
      %s41 = sshll.u32 [#allocation6], 4
      %s42 = int_to_ptr.vmem [resolvable:$true] %s41
      %44 = dma.hbm_to_vmem [thread:$0]  %s40, 96, %s42, [#allocation5]
    $region13: #{tpu_custom_call.1} parent=1 // pred_fallthru
      _
    // Predicated region
    $region14: #{tpu_custom_call.1} parent=1 // pred_check
      _
    $region15: #{tpu_custom_call.1} parent=1 // pred_check_branch
      %46 = sbr.rel (0) target = $region17
    $region16: #{tpu_custom_call.1} parent=1 // pred_region
      %48 = vsyncadd [#allocation8], 0
      %s50 = sshll.u32 %s3, 4
      %s51 = int_to_ptr.hbm [resolvable:$true] %s50
      %s52 = sshll.u32 [#allocation7], 4
      %s53 = int_to_ptr.vmem [resolvable:$true] %s52
      %55 = dma.hbm_to_vmem [thread:$0]  %s51, 64, %s53, [#allocation8]
    $region17: #{tpu_custom_call.1} parent=1 // pred_fallthru
      _
    // Predicated region
    $region18: #{tpu_custom_call.1} parent=1 // pred_check
      _
    $region19: #{tpu_custom_call.1} parent=1 // pred_check_branch
      %57 = sbr.rel (0) target = $region21
    $region20: #{tpu_custom_call.1} parent=1 // pred_region
      %59 = dma.done [#allocation3], 96
    $region21: #{tpu_custom_call.1} parent=1 // pred_fallthru
      _
    // Predicated region
    $region22: #{tpu_custom_call.1} parent=1 // pred_check
      _
    $region23: #{tpu_custom_call.1} parent=1 // pred_check_branch
      %61 = sbr.rel (0) target = $region25
    $region24: #{tpu_custom_call.1} parent=1 // pred_region
      %63 = dma.done [#allocation5], 96
    $region25: #{tpu_custom_call.1} parent=1 // pred_fallthru
      _
    // Predicated region
    $region26: #{tpu_custom_call.1} parent=1 // pred_check
      _
    $region27: #{tpu_custom_call.1} parent=1 // pred_check_branch
      %65 = sbr.rel (0) target = $region29
    $region28: #{tpu_custom_call.1} parent=1 // pred_region
      %67 = dma.done [#allocation5], 96
    $region29: #{tpu_custom_call.1} parent=1 // pred_fallthru
      _
    // Predicated region
    $region30: #{tpu_custom_call.1} parent=1 // pred_check
      _
    $region31: #{tpu_custom_call.1} parent=1 // pred_check_branch
      %69 = sbr.rel (0) target = $region33
    $region32: #{tpu_custom_call.1} parent=1 // pred_region
      %71 = dma.done [#allocation8], 64
    $region33: #{tpu_custom_call.1} parent=1 // pred_fallthru
      _
    %v72 = vld [vmem:[#allocation2] sm:$0x3f]
    %v73 = vld [vmem:[#allocation4] sm:$0x3f]
    %v74 = vsub.f32 %v72, %v73
    %v75 = vmul.f32 %v74, %v74
    %v76 = vld [vmem:[#allocation6] sm:$0x3f]
    %v77 = vmul.f32 %v75, %v76
    %v78 = vld [vmem:[#allocation7] sm:$0xf]
    %v79 = vmul.f32 %v78, %v78
    %81 = vst [vmem:[#allocation1] ss:$4 sm:$0xff] %v79
    %v82 = vld.sshfl [vmem:[#allocation1] sm:$0xff pattern:$0x73625140]
    %v83 = vld.sshfl [vmem:[#allocation1 + $0x8] sm:$0xff pattern:$0x73625140]
    %vm86 = vcmask 1041408
    %v87 = vsel %vm86, %v82, 0.0
    %vm88 = vcmask 517120
    %v89 = vsel %vm88, %v83, 0.0
    %v90 = vadd.f32 %v87, %v89
    %91 = vadd.xlane.f32.xlu0 %v90
    %v92 = vpop.xlane.xlu0 %91
    %v93 = vmul.f32 %v92, 0.015625
    %95 = vst [vmem:[#allocation1] ss:$4 sm:$0xff] %v77
    %v96 = vld.sshfl [vmem:[#allocation1] sm:$0xff pattern:$0x73625140]
    %v97 = vld.sshfl [vmem:[#allocation1 + $0x8] sm:$0xff pattern:$0x73625140]
    %v98 = vld.sshfl [vmem:[#allocation1 + $0x10] sm:$0xff pattern:$0x73625140]
    %v102 = vsel %vm86, %v96, 0.0
    %v103 = vsel %vm86, %v97, 0.0
    %v104 = vadd.f32 %v102, %v103
    %v105 = vsel %vm86, %v98, 0.0
    %v106 = vadd.f32 %v104, %v105
    %107 = vadd.xlane.f32.xlu0 %v106
    %v108 = vpop.xlane.xlu0 %107
    %v109 = vadd.f32 %v108, %v93
    %vm110 = vcmask 1024
    %111 = vst.msk [vmem:[%s4] sm:$0x3] %vm110, %v109
    // Predicated region
    $region34: #{tpu_custom_call.1} parent=1 // pred_check
      _
    $region35: #{tpu_custom_call.1} parent=1 // pred_check_branch
      %113 = sbr.rel (0) target = $region37
    $region36: #{tpu_custom_call.1} parent=1 // pred_region
      _
    $region37: #{tpu_custom_call.1} parent=1 // pred_fallthru
      _
    // Predicated region
    $region38: #{tpu_custom_call.1} parent=1 // pred_check
      _
    $region39: #{tpu_custom_call.1} parent=1 // pred_check_branch
      %115 = sbr.rel (0) target = $region41
    $region40: #{tpu_custom_call.1} parent=1 // pred_region
      _
    $region41: #{tpu_custom_call.1} parent=1 // pred_fallthru
      _
    %116 = vsyncpa [#allocation3], 1
    %117 = vsyncpa [#allocation5], 1
    %118 = vsyncpa [#allocation8], 1

</llo_original>
